<compile_context>
chip_gen: v5e
topology: v5e:2x2
jax: 0.10.0
libtpu: 0.0.40
codegen_flags: <defaults>
</compile_context>

<pallas_src>
from functools import partial

import numpy as np
import jax
import jax.numpy as jnp
from jax import lax
from jax.experimental import pallas as pl
from jax.experimental.pallas import tpu as pltpu

LAMBDA = 0.1        # fista(dic, x, 0.1, 100, gid)
MAX_ITER = 100
TOL = 1e-4
# Convergence-check cadence (perf review): check every CHECK_EVERY iterations.
# 1 == exact per-iteration parity with the torch early-break.
CHECK_EVERY = 4
# Lane block target: maximize on v5e/v6e (single TC, 128 MiB VMEM); the VMEM
# budget cap in _choose_lane_block keeps it safe on v7x (64 MiB VMEM).
LANE_TARGET = 8192
# Optional bf16 MXU operands for the per-iteration A @ y (v6e/v7x). Off by
# default: needs re-validation of the FISTA fixed point vs the 1e-4 tolerance.
USE_BF16_MATMUL = False

assert MAX_ITER % CHECK_EVERY == 0, "CHECK_EVERY must divide MAX_ITER"


# ----------------------------------------------------------------------------
# Host-side (numpy) parameter construction — hoisted out of the hot path.
# ----------------------------------------------------------------------------
def _creat_real_dictionary_np(T, rr, theta):
    """dic[i] = [1, rr**i * cos(i*theta), rr**i * sin(i*theta)]  -> (T, 1+2N)."""
    i = np.arange(T, dtype=np.float32)[:, None]               # (T, 1)
    pow_r = rr[None, :] ** i                                    # (T, N)
    W1 = pow_r * np.cos(i * theta[None, :])
    W2 = pow_r * np.sin(i * theta[None, :])
    ones = np.ones((T, 1), np.float32)
    return np.concatenate([ones, W1, W2], axis=1).astype(np.float32)


def creat_real_dictionary(T, rr, theta):
    """jnp version (used by the pure-JAX reference)."""
    i = jnp.arange(T, dtype=jnp.float32)[:, None]
    pow_r = rr[None, :] ** i
    W1 = pow_r * jnp.cos(i * theta[None, :])
    W2 = pow_r * jnp.sin(i * theta[None, :])
    ones = jnp.ones((T, 1), jnp.float32)
    return jnp.concatenate([ones, W1, W2], axis=1)


def _momentum_schedule_np(max_iter):
    """tt[k] = (t_k - 1) / t_{k+1}, t_0 = 1 — data-independent FISTA schedule."""
    tt = np.zeros((max_iter,), np.float32)
    t = 1.0
    for k in range(max_iter):
        t_new = (1.0 + np.sqrt(1.0 + 4.0 * t * t)) / 2.0
        tt[k] = (t - 1.0) / t_new
        t = t_new
    return tt


def _choose_lane_block(l128, T, Tp, P):
    """Lane block width: as wide as the VMEM budget allows, >=2 blocks on v7x."""
    # Per-lane VMEM: double-buffered Y/out tiles + ~8 (P, lane) loop temporaries.
    bytes_per_lane = 4 * (2 * T + 2 * Tp + 8 * P)
    budget = 24 << 20            # under the 32 MiB scoped default on v5e/v6e/v7x
    cap = max(128, (budget // bytes_per_lane) // 128 * 128)
    blk = min(LANE_TARGET, l128, cap)
    # v7x has 2 TensorCores per chip: give the "parallel" lane grid >= 2 blocks
    # so the second core is not idle (best-effort device-kind sniff).
    try:
        kind = jax.devices()[0].device_kind.lower()
    except Exception:
        kind = ""
    if "v7" in kind and l128 >= 256 and blk >= l128:
        blk = max(128, ((l128 // 2 + 127) // 128) * 128)
    return blk


# ----------------------------------------------------------------------------
# Kernel: FISTA sparse coding + dictionary decode for one lane block.
# ----------------------------------------------------------------------------
def _fista_decode_kernel(tt_ref, a_ref, dts_ref, ddec_ref, y_ref, o_ref, *,
                         P, M, lambd, check_every):
    """
    tt_ref  : (MAX_ITER,) SMEM  precomputed momentum schedule tt[k]
    a_ref   : (P,  P)     VMEM  A = I - DtD / L        (precomputed)
    dts_ref : (P,  T)     VMEM  D^T / L                (precomputed)
    ddec_ref: (Tp, P)     VMEM  decoder dictionary (T + PRE rows)
    y_ref   : (T,  LANE)  VMEM  input block (batch*feature lanes)
    o_ref   : (Tp, LANE)  VMEM  reconstructed output block
    """
    A = a_ref[...]
    Ddec = ddec_ref[...]
    Y = y_ref[...]
    # DtY already carries the 1/L scaling (folded into Dts in the wrapper).
    DtY = jnp.dot(dts_ref[...], Y, preferred_element_type=jnp.float32)  # (P, LANE)
    x0 = jnp.zeros_like(DtY)
    if USE_BF16_MATMUL:
        A = A.astype(jnp.bfloat16)

    n_chunks = MAX_ITER // check_every
    thr0 = float((TOL * M) ** 2)     # torch divides by M on iteration 0 ...
    thrP = float((TOL * P) ** 2)     # ... and by P = 1+2N afterwards.

    def cond_fn(carry):
        c, _, _, done = carry
        return jnp.logical_and(c < n_chunks, jnp.logical_not(done))

    def body_fn(carry):
        c, x_cur, y_cur, _ = carry
        it_base = c * check_every
        x_prev = x_cur
        # check_every unrolled FISTA iterations (static Python loop).
        for k in range(check_every):
            tt = tt_ref[it_base + k]                       # SMEM scalar load
            yy = y_cur.astype(jnp.bfloat16) if USE_BF16_MATMUL else y_cur
            z = jnp.dot(A, yy, preferred_element_type=jnp.float32) + DtY
            # nn.Softshrink(lambd) in 3-op clip form: max, min, sub.
            x_new = z - jnp.clip(z, -lambd, lambd)
            y_cur = x_new * (1.0 + tt) - x_cur * tt
            x_prev = x_cur
            x_cur = x_new
        # Amortized convergence check: squared norm vs squared threshold,
        # sublane-first reduction (P, L) -> (1, L) -> scalar; no sqrt / divide.
        d = x_prev - x_cur
        nrm_sq = jnp.sum(jnp.sum(d * d, axis=0, keepdims=True))
        it_last = it_base + (check_every - 1)
        thr = jnp.where(it_last == 0, jnp.float32(thr0), jnp.float32(thrP))
        done = nrm_sq < thr
        return c + 1, x_cur, y_cur, done

    init = (jnp.int32(0), x0, x0, jnp.bool_(False))
    _, x_fin, _, _ = lax.while_loop(cond_fn, body_fn, init)

    # Decoder: result = dic_dec @ sparsecode
    # TODO(synk): torch casts the decoder dictionary to float64; TPU Pallas keeps f32.
    o_ref[...] = jnp.dot(Ddec, x_fin, preferred_element_type=jnp.float32)


# ----------------------------------------------------------------------------
# Module wrapper
# ----------------------------------------------------------------------------
class SparseCodingGenerator:
    """JAX/Pallas equivalent of sparseCodingGenerator (Encoder FISTA + Decoder)."""

    def __init__(self, Drr, Dtheta, PRE):
        self.rr = np.asarray(Drr, np.float32)
        self.theta = np.asarray(Dtheta, np.float32)
        self.PRE = int(PRE)
        self._fwd_cache = {}     # (T, B, M) -> jitted forward

    def _build_forward(self, T, B, M):
        N = self.rr.shape[0]
        P = 1 + 2 * N
        Tp = T + self.PRE

        # ---- one-time parameter-only math on the host (no per-call recompute) ----
        D = _creat_real_dictionary_np(T, self.rr, self.theta)        # (T,  P)
        Ddec = _creat_real_dictionary_np(Tp, self.rr, self.theta)    # (Tp, P)
        DtD = D.T @ D                                                 # (P,  P)
        # torch.norm(DtD, 2) with dim=None == 2-norm of the flattened tensor.
        L_norm = float(np.sqrt(np.sum(DtD * DtD)))
        linv = 1.0 / L_norm
        A = (np.eye(P, dtype=np.float32) - DtD * np.float32(linv)).astype(np.float32)
        Dts = (D.T * np.float32(linv)).astype(np.float32)             # folds 1/L into DtY
        lambd = float(LAMBDA * linv)
        tt = _momentum_schedule_np(MAX_ITER)                          # (MAX_ITER,)

        # ---- lane-dense layout: (B, T, M) -> (T, B*M) padded to 128-mult ----
        lanes = B * M
        l128 = ((lanes + 127) // 128) * 128
        lane_blk = _choose_lane_block(l128, T, Tp, P)
        l_pad = ((l128 + lane_blk - 1) // lane_blk) * lane_blk
        grid = (l_pad // lane_blk,)

        kernel = partial(_fista_decode_kernel, P=P, M=M, lambd=lambd,
                         check_every=CHECK_EVERY)
        call = pl.pallas_call(
            kernel,
            out_shape=jax.ShapeDtypeStruct((Tp, l_pad), jnp.float32),
            grid=grid,
            in_specs=[
                pl.BlockSpec(memory_space=pltpu.MemorySpace.SMEM),   # tt table
                pl.BlockSpec((P, P), lambda i: (0, 0)),              # A (resident)
                pl.BlockSpec((P, T), lambda i: (0, 0)),              # D^T / L
                pl.BlockSpec((Tp, P), lambda i: (0, 0)),             # decode dict
                pl.BlockSpec((T, lane_blk), lambda i: (0, i)),       # Y block
            ],
            out_specs=pl.BlockSpec((Tp, lane_blk), lambda i: (0, i)),
            compiler_params=pltpu.CompilerParams(
                dimension_semantics=("parallel",)),
        )

        tt_j = jnp.asarray(tt)
        A_j = jnp.asarray(A)
        Dts_j = jnp.asarray(Dts)
        Ddec_j = jnp.asarray(Ddec)

        @jax.jit
        def fwd(x):
            Y2 = jnp.transpose(x, (1, 0, 2)).reshape(T, lanes).astype(jnp.float32)
            Y2 = jnp.pad(Y2, ((0, 0), (0, l_pad - lanes)))            # (T, l_pad)
            out2 = call(tt_j, A_j, Dts_j, Ddec_j, Y2)
            out2 = out2[:, :lanes]                                    # drop lane pad
            return out2.reshape(Tp, B, M).transpose(1, 0, 2)          # (B, Tp, M)

        return fwd

    def __call__(self, x, T):
        B, T_in, M = x.shape
        assert T_in == T
        key = (int(T), int(B), int(M))
        fwd = self._fwd_cache.get(key)
        if fwd is None:
            fwd = self._build_forward(T, B, M)
            self._fwd_cache[key] = fwd
        return fwd(x)


# ----------------------------------------------------------------------------
# Pure-JAX/python port of the torch forward (incl. per-iteration early break)
# ----------------------------------------------------------------------------
def reference_forward(x, rr, theta, PRE, T):
    B, _, M = x.shape
    D = creat_real_dictionary(T, rr, theta)
    P = D.shape[1]
    DtD = D.T @ D
    L = jnp.sqrt(jnp.sum(DtD * DtD))
    linv = 1.0 / L
    DtY = jnp.einsum('pt,btm->bpm', D.T, x, precision='highest') * linv
    lambd = float(LAMBDA * linv)
    A = jnp.eye(P, dtype=jnp.float32) - DtD * linv

    def softshrink(z):
        return jnp.where(z > lambd, z - lambd,
                         jnp.where(z < -lambd, z + lambd, 0.0))

    x_old = jnp.zeros((P, M), jnp.float32)
    y_old = x_old
    t = 1.0
    for _ in range(MAX_ITER):
        Ay = jnp.einsum('pq,...qm->...pm', A, y_old, precision='highest')
        x_new = softshrink(Ay + DtY)
        t_new = (1.0 + np.sqrt(1.0 + 4.0 * t * t)) / 2.0
        tt = (t - 1.0) / t_new
        y_old = x_new * (1.0 + tt) - x_old * tt
        if float(jnp.sqrt(jnp.sum((x_old - x_new) ** 2))) / x_old.shape[1] < TOL:
            x_old = x_new
            break
        t = t_new
        x_old = x_new
    Ddec = creat_real_dictionary(T + PRE, rr, theta)
    return jnp.einsum('tp,bpm->btm', Ddec, x_old, precision='highest')


if __name__ == "__main__":
    key = jax.random.PRNGKey(0)
    k1, k2, k3 = jax.random.split(key, 3)

    N = 8                 # number of pole pairs -> P = 1 + 2N = 17
    B, T, M = 2, 8, 16    # batch, time steps, feature dim
    PRE = 2               # extrapolation length for the decoder

    Drr = jax.random.uniform(k1, (N,), jnp.float32, 0.8, 1.1)
    Dtheta = jax.random.uniform(k2, (N,), jnp.float32, 0.0, np.pi)
    x = jax.random.normal(k3, (B, T, M), jnp.float32)

    model = SparseCodingGenerator(Drr, Dtheta, PRE)
    out = jax.block_until_ready(model(x, T))

    assert out.shape == (B, T + PRE, M), out.shape
    assert bool(jnp.all(jnp.isfinite(out)))

    # The kernel checks convergence every CHECK_EVERY iterations, so it may run
    # up to CHECK_EVERY-1 extra refining FISTA steps past the torch break point;
    # the tolerance budgets for that bounded extra drift.
    ref = reference_forward(x, Drr, Dtheta, PRE, T)
    np.testing.assert_allclose(np.asarray(out), np.asarray(ref),
                               rtol=2e-2, atol=2e-2)
    print("KERNEL_OK")
</pallas_src>

<mosaic_0001>
module attributes {stable_mosaic.version = 11 : i64} {
  func.func @_fista_decode_kernel(%arg0: i32, %arg1: memref<100xf32, #tpu.memory_space<smem>>, %arg2: memref<17x17xf32, #tpu.memory_space<vmem>>, %arg3: memref<17x8xf32, #tpu.memory_space<vmem>>, %arg4: memref<10x17xf32, #tpu.memory_space<vmem>>, %arg5: memref<8x128xf32, #tpu.memory_space<vmem>>, %arg6: memref<10x128xf32, #tpu.memory_space<vmem>>) attributes {dimension_semantics = [#tpu.dimension_semantics<parallel>], iteration_bounds = array<i64: 1>, scalar_prefetch = 0 : i64, scratch_operands = 0 : i64, tpu.core_type = #tpu.core_type<tc>, window_params = [{transform_indices = @transform_0, window_bounds = array<i64: 100>}, {pipeline_mode = #tpu.pipeline_mode<synchronous>, transform_indices = @transform_1, window_bounds = array<i64: 17, 17>}, {pipeline_mode = #tpu.pipeline_mode<synchronous>, transform_indices = @transform_2, window_bounds = array<i64: 17, 8>}, {pipeline_mode = #tpu.pipeline_mode<synchronous>, transform_indices = @transform_3, window_bounds = array<i64: 10, 17>}, {transform_indices = @transform_4, window_bounds = array<i64: 8, 128>}, {transform_indices = @transform_5, window_bounds = array<i64: 10, 128>}]} {
    %c0 = arith.constant 0 : index
    %c0_0 = arith.constant 0 : index
    %0 = vector.load %arg2[%c0, %c0_0] : memref<17x17xf32, #tpu.memory_space<vmem>>, vector<17x17xf32>
    %c0_1 = arith.constant 0 : index
    %c0_2 = arith.constant 0 : index
    %1 = vector.load %arg4[%c0_1, %c0_2] : memref<10x17xf32, #tpu.memory_space<vmem>>, vector<10x17xf32>
    %c0_3 = arith.constant 0 : index
    %c0_4 = arith.constant 0 : index
    %2 = vector.load %arg5[%c0_3, %c0_4] : memref<8x128xf32, #tpu.memory_space<vmem>>, vector<8x128xf32>
    %c0_5 = arith.constant 0 : index
    %c0_6 = arith.constant 0 : index
    %3 = vector.load %arg3[%c0_5, %c0_6] : memref<17x8xf32, #tpu.memory_space<vmem>>, vector<17x8xf32>
    %cst = arith.constant dense<0.000000e+00> : vector<17x128xf32>
    %4 = tpu.matmul %3, %2, %cst {dimension_numbers = #tpu.dot_dimension_numbers<[1], [0], [0], [1], [0, 0, 1, 1], [], []>} : vector<17x8xf32>, vector<8x128xf32>, vector<17x128xf32> -> vector<17x128xf32>
    %cst_7 = arith.constant 0.000000e+00 : f32
    %5 = vector.broadcast %cst_7 : f32 to vector<17x128xf32>
    %c0_i32 = arith.constant 0 : i32
    %false = arith.constant false
    %6:4 = scf.while (%arg7 = %c0_i32, %arg8 = %5, %arg9 = %5, %arg10 = %false) : (i32, vector<17x128xf32>, vector<17x128xf32>, i1) -> (i32, vector<17x128xf32>, vector<17x128xf32>, i1) {
      %c25_i32 = arith.constant 25 : i32
      %9 = arith.cmpi slt, %arg7, %c25_i32 : i32
      %true = arith.constant true
      %10 = arith.xori %arg10, %true : i1
      %11 = arith.andi %9, %10 : i1
      scf.condition(%11) %arg7, %arg8, %arg9, %arg10 : i32, vector<17x128xf32>, vector<17x128xf32>, i1
    } do {
    ^bb0(%arg7: i32, %arg8: vector<17x128xf32>, %arg9: vector<17x128xf32>, %arg10: i1):
      %c4_i32 = arith.constant 4 : i32
      %9 = arith.muli %arg7, %c4_i32 : i32
      %c0_i32_11 = arith.constant 0 : i32
      %10 = arith.addi %9, %c0_i32_11 : i32
      %11 = arith.index_cast %10 : i32 to index
      %12 = memref.load %arg1[%11] : memref<100xf32, #tpu.memory_space<smem>>
      %cst_12 = arith.constant dense<0.000000e+00> : vector<17x128xf32>
      %13 = tpu.matmul %0, %arg9, %cst_12 {dimension_numbers = #tpu.dot_dimension_numbers<[1], [0], [0], [1], [0, 0, 1, 1], [], []>} : vector<17x17xf32>, vector<17x128xf32>, vector<17x128xf32> -> vector<17x128xf32>
      %14 = arith.addf %13, %4 : vector<17x128xf32>
      %cst_13 = arith.constant -0.002911377 : f32
      %cst_14 = arith.constant 0.002911377 : f32
      %15 = vector.broadcast %cst_13 : f32 to vector<17x128xf32>
      %16 = arith.maximumf %15, %14 : vector<17x128xf32>
      %17 = vector.broadcast %cst_14 : f32 to vector<17x128xf32>
      %18 = arith.minimumf %17, %16 : vector<17x128xf32>
      %19 = arith.subf %14, %18 : vector<17x128xf32>
      %cst_15 = arith.constant 1.000000e+00 : f32
      %20 = arith.addf %cst_15, %12 : f32
      %21 = vector.broadcast %20 : f32 to vector<17x128xf32>
      %22 = arith.mulf %19, %21 : vector<17x128xf32>
      %23 = vector.broadcast %12 : f32 to vector<17x128xf32>
      %24 = arith.mulf %arg8, %23 : vector<17x128xf32>
      %25 = arith.subf %22, %24 : vector<17x128xf32>
      %c1_i32 = arith.constant 1 : i32
      %26 = arith.addi %9, %c1_i32 : i32
      %27 = arith.index_cast %26 : i32 to index
      %28 = memref.load %arg1[%27] : memref<100xf32, #tpu.memory_space<smem>>
      %cst_16 = arith.constant dense<0.000000e+00> : vector<17x128xf32>
      %29 = tpu.matmul %0, %25, %cst_16 {dimension_numbers = #tpu.dot_dimension_numbers<[1], [0], [0], [1], [0, 0, 1, 1], [], []>} : vector<17x17xf32>, vector<17x128xf32>, vector<17x128xf32> -> vector<17x128xf32>
      %30 = arith.addf %29, %4 : vector<17x128xf32>
      %cst_17 = arith.constant -0.002911377 : f32
      %cst_18 = arith.constant 0.002911377 : f32
      %31 = vector.broadcast %cst_17 : f32 to vector<17x128xf32>
      %32 = arith.maximumf %31, %30 : vector<17x128xf32>
      %33 = vector.broadcast %cst_18 : f32 to vector<17x128xf32>
      %34 = arith.minimumf %33, %32 : vector<17x128xf32>
      %35 = arith.subf %30, %34 : vector<17x128xf32>
      %cst_19 = arith.constant 1.000000e+00 : f32
      %36 = arith.addf %cst_19, %28 : f32
      %37 = vector.broadcast %36 : f32 to vector<17x128xf32>
      %38 = arith.mulf %35, %37 : vector<17x128xf32>
      %39 = vector.broadcast %28 : f32 to vector<17x128xf32>
      %40 = arith.mulf %19, %39 : vector<17x128xf32>
      %41 = arith.subf %38, %40 : vector<17x128xf32>
      %c2_i32 = arith.constant 2 : i32
      %42 = arith.addi %9, %c2_i32 : i32
      %43 = arith.index_cast %42 : i32 to index
      %44 = memref.load %arg1[%43] : memref<100xf32, #tpu.memory_space<smem>>
      %cst_20 = arith.constant dense<0.000000e+00> : vector<17x128xf32>
      %45 = tpu.matmul %0, %41, %cst_20 {dimension_numbers = #tpu.dot_dimension_numbers<[1], [0], [0], [1], [0, 0, 1, 1], [], []>} : vector<17x17xf32>, vector<17x128xf32>, vector<17x128xf32> -> vector<17x128xf32>
      %46 = arith.addf %45, %4 : vector<17x128xf32>
      %cst_21 = arith.constant -0.002911377 : f32
      %cst_22 = arith.constant 0.002911377 : f32
      %47 = vector.broadcast %cst_21 : f32 to vector<17x128xf32>
      %48 = arith.maximumf %47, %46 : vector<17x128xf32>
      %49 = vector.broadcast %cst_22 : f32 to vector<17x128xf32>
      %50 = arith.minimumf %49, %48 : vector<17x128xf32>
      %51 = arith.subf %46, %50 : vector<17x128xf32>
      %cst_23 = arith.constant 1.000000e+00 : f32
      %52 = arith.addf %cst_23, %44 : f32
      %53 = vector.broadcast %52 : f32 to vector<17x128xf32>
      %54 = arith.mulf %51, %53 : vector<17x128xf32>
      %55 = vector.broadcast %44 : f32 to vector<17x128xf32>
      %56 = arith.mulf %35, %55 : vector<17x128xf32>
      %57 = arith.subf %54, %56 : vector<17x128xf32>
      %c3_i32 = arith.constant 3 : i32
      %58 = arith.addi %9, %c3_i32 : i32
      %59 = arith.index_cast %58 : i32 to index
      %60 = memref.load %arg1[%59] : memref<100xf32, #tpu.memory_space<smem>>
      %cst_24 = arith.constant dense<0.000000e+00> : vector<17x128xf32>
      %61 = tpu.matmul %0, %57, %cst_24 {dimension_numbers = #tpu.dot_dimension_numbers<[1], [0], [0], [1], [0, 0, 1, 1], [], []>} : vector<17x17xf32>, vector<17x128xf32>, vector<17x128xf32> -> vector<17x128xf32>
      %62 = arith.addf %61, %4 : vector<17x128xf32>
      %cst_25 = arith.constant -0.002911377 : f32
      %cst_26 = arith.constant 0.002911377 : f32
      %63 = vector.broadcast %cst_25 : f32 to vector<17x128xf32>
      %64 = arith.maximumf %63, %62 : vector<17x128xf32>
      %65 = vector.broadcast %cst_26 : f32 to vector<17x128xf32>
      %66 = arith.minimumf %65, %64 : vector<17x128xf32>
      %67 = arith.subf %62, %66 : vector<17x128xf32>
      %cst_27 = arith.constant 1.000000e+00 : f32
      %68 = arith.addf %cst_27, %60 : f32
      %69 = vector.broadcast %68 : f32 to vector<17x128xf32>
      %70 = arith.mulf %67, %69 : vector<17x128xf32>
      %71 = vector.broadcast %60 : f32 to vector<17x128xf32>
      %72 = arith.mulf %51, %71 : vector<17x128xf32>
      %73 = arith.subf %70, %72 : vector<17x128xf32>
      %74 = arith.subf %51, %67 : vector<17x128xf32>
      %75 = arith.mulf %74, %74 : vector<17x128xf32>
      %cst_28 = arith.constant dense<0.000000e+00> : vector<128xf32>
      %76 = vector.multi_reduction <add>, %75, %cst_28 [0] : vector<17x128xf32> to vector<128xf32>
      %77 = vector.shape_cast %76 : vector<128xf32> to vector<1x128xf32>
      %78 = vector.shape_cast %77 : vector<1x128xf32> to vector<1x1x128xf32>
      %cst_29 = arith.constant dense<0.000000e+00> : vector<1xf32>
      %79 = vector.multi_reduction <add>, %78, %cst_29 [1, 2] : vector<1x1x128xf32> to vector<1xf32>
      %80 = vector.shape_cast %79 : vector<1xf32> to vector<1x1x1xf32>
      %81 = vector.extract %80[0, 0, 0] : f32 from vector<1x1x1xf32>
      %c3_i32_30 = arith.constant 3 : i32
      %82 = arith.addi %9, %c3_i32_30 : i32
      %c0_i32_31 = arith.constant 0 : i32
      %83 = arith.cmpi eq, %82, %c0_i32_31 : i32
      %cst_32 = arith.constant 2.560000e-06 : f32
      %cst_33 = arith.constant 2.890000e-06 : f32
      %84 = arith.select %83, %cst_32, %cst_33 : f32
      %85 = arith.cmpf olt, %81, %84 : f32
      %c1_i32_34 = arith.constant 1 : i32
      %86 = arith.addi %arg7, %c1_i32_34 : i32
      scf.yield %86, %67, %73, %85 : i32, vector<17x128xf32>, vector<17x128xf32>, i1
    }
    %cst_8 = arith.constant dense<0.000000e+00> : vector<10x128xf32>
    %7 = tpu.matmul %1, %6#1, %cst_8 {dimension_numbers = #tpu.dot_dimension_numbers<[1], [0], [0], [1], [0, 0, 1, 1], [], []>} : vector<10x17xf32>, vector<17x128xf32>, vector<10x128xf32> -> vector<10x128xf32>
    %c0_9 = arith.constant 0 : index
    %c0_10 = arith.constant 0 : index
    %8 = vector.load %arg6[%c0_9, %c0_10] : memref<10x128xf32, #tpu.memory_space<vmem>>, vector<10x128xf32>
    tpu.vector_store %arg6[%c0_9, %c0_10], %7 {strides = array<i32>} : memref<10x128xf32, #tpu.memory_space<vmem>>, vector<10x128xf32>,
    return
  }
  func.func @transform_0(%arg0: i32) -> i32 {
    %c0_i32 = arith.constant 0 : i32
    %c0_i32_0 = arith.constant 0 : i32
    return %c0_i32 : i32
  }
  func.func @transform_1(%arg0: i32) -> (i32, i32) {
    %c0_i32 = arith.constant 0 : i32
    %c0_i32_0 = arith.constant 0 : i32
    %c0_i32_1 = arith.constant 0 : i32
    return %c0_i32, %c0_i32_0 : i32, i32
  }
  func.func @transform_2(%arg0: i32) -> (i32, i32) {
    %c0_i32 = arith.constant 0 : i32
    %c0_i32_0 = arith.constant 0 : i32
    %c0_i32_1 = arith.constant 0 : i32
    return %c0_i32, %c0_i32_0 : i32, i32
  }
  func.func @transform_3(%arg0: i32) -> (i32, i32) {
    %c0_i32 = arith.constant 0 : i32
    %c0_i32_0 = arith.constant 0 : i32
    %c0_i32_1 = arith.constant 0 : i32
    return %c0_i32, %c0_i32_0 : i32, i32
  }
  func.func @transform_4(%arg0: i32) -> (i32, i32) {
    %c0_i32 = arith.constant 0 : i32
    %c0_i32_0 = arith.constant 0 : i32
    return %c0_i32, %arg0 : i32, i32
  }
  func.func @transform_5(%arg0: i32) -> (i32, i32) {
    %c0_i32 = arith.constant 0 : i32
    %c0_i32_0 = arith.constant 0 : i32
    return %c0_i32, %arg0 : i32, i32
  }
}

</mosaic_0001>

<llo_original>
// kernel: fwd.1
$region0: #{fwd.1}
  #allocation0 [shape = 'u32[]', space=smem, size = 0x4, offset = 0x4, fixed_abs, tag = 'smem constant byte address 0x4 - core index']
  #allocation1 [shape = 'u32[72,128]{1,0:T(1,128)}', space=vmem, size = 0x9000, scoped, tag = 'internal scratch']
  %s0 = inlined_call_operand.vmem [shape: f32[100], index: 0, kind: input, shape index: {}]
  %s1 = inlined_call_operand.vmem [shape: f32[17,17], index: 1, kind: input, shape index: {}]
  %s2 = inlined_call_operand.vmem [shape: f32[17,8], index: 2, kind: input, shape index: {}]
  %s3 = inlined_call_operand.vmem [shape: f32[10,17], index: 3, kind: input, shape index: {}]
  %s4 = inlined_call_operand.vmem [shape: f32[8,128], index: 4, kind: input, shape index: {}]
  %s5 = inlined_call_operand.vmem [shape: f32[10,128], index: 5, kind: output, shape index: {}]
  %s6 = sld [smem:[#allocation0]]
  $region41: #{fwd.1} parent=0
    _
  %s8 = ssub.s32 1, %s6
  %s9 = scalar_select 0, %s8, %s6
  $region1: #{fwd.1} parent=0
    #allocation2 [shape = 'u8[512]{0}', space=smem, size = 0x200, scoped, tag = 'input window, operand 0, single buffered']
    #allocation3 [shape = 's32[1]{0}', space=sflag, size = 0x4, scoped, tag = 'scoped memory for fwd.1']
    %10 = vsyncpa [#allocation3], 0
    // Predicated region
    $region2: #{fwd.1} parent=1 // pred_check
      _
    $region3: #{fwd.1} parent=1 // pred_check_branch
      %12 = sbr.rel (0) target = $region5
    $region4: #{fwd.1} parent=1 // pred_region
      %14 = vsyncadd [#allocation3], 0
      %s16 = sshll.u32 %s0, 4
      %s17 = int_to_ptr.vmem [resolvable:$true] %s16
      %19 = dma.vmem_to_smem %s17, 16, [#allocation2], [#allocation3]
    $region5: #{fwd.1} parent=1 // pred_fallthru
      _
    // Predicated region
    $region6: #{fwd.1} parent=1 // pred_check
      _
    $region7: #{fwd.1} parent=1 // pred_check_branch
      %21 = sbr.rel (0) target = $region9
    $region8: #{fwd.1} parent=1 // pred_region
      _
    $region9: #{fwd.1} parent=1 // pred_fallthru
      _
    // Predicated region
    $region10: #{fwd.1} parent=1 // pred_check
      _
    $region11: #{fwd.1} parent=1 // pred_check_branch
      %23 = sbr.rel (0) target = $region13
    $region12: #{fwd.1} parent=1 // pred_region
      _
    $region13: #{fwd.1} parent=1 // pred_fallthru
      _
    // Predicated region
    $region14: #{fwd.1} parent=1 // pred_check
      _
    $region15: #{fwd.1} parent=1 // pred_check_branch
      %25 = sbr.rel (0) target = $region17
    $region16: #{fwd.1} parent=1 // pred_region
      _
    $region17: #{fwd.1} parent=1 // pred_fallthru
      _
    // Predicated region
    $region18: #{fwd.1} parent=1 // pred_check
      _
    $region19: #{fwd.1} parent=1 // pred_check_branch
      %27 = sbr.rel (0) target = $region21
    $region20: #{fwd.1} parent=1 // pred_region
      _
    $region21: #{fwd.1} parent=1 // pred_fallthru
      _
    // Predicated region
    $region22: #{fwd.1} parent=1 // pred_check
      _
    $region23: #{fwd.1} parent=1 // pred_check_branch
      %29 = sbr.rel (0) target = $region25
    $region24: #{fwd.1} parent=1 // pred_region
      %31 = dma.done [#allocation3], 16
    $region25: #{fwd.1} parent=1 // pred_fallthru
      _
    %32 = sfence
    %v33 = vld [vmem:[%s1] sm:$0xff]
    %v34 = vld [vmem:[%s1 + $0x8] sm:$0xff]
    %v35 = vld [vmem:[%s1 + $0x10] sm:$0x1]
    %v36 = vld [vmem:[%s3] sm:$0xff]
    %v37 = vld [vmem:[%s3 + $0x8] sm:$0x3]
    %v38 = vld [vmem:[%s4] sm:$0xff]
    %v39 = vld [vmem:[%s2] sm:$0xff]
    %v40 = vld [vmem:[%s2 + $0x8] sm:$0xff]
    %v41 = vld [vmem:[%s2 + $0x10] sm:$0x1]
    %vm42 = vcmask 64512
    %v44 = vsel %vm42, %v39, 0
    %v47 = vsel %vm42, %v40, 0
    %v50 = vsel %vm42, %v41, 0
    %52 = vmatpush.msra.mxu0 0.0
    %53 = vmatpush.msra.mxu0 0.0
    %54 = vmatpush.msra.mxu0 0.0
    %55 = vmatpush.msra.mxu0 0.0
    %56 = vmatpush.msra.mxu0 0.0
    %57 = vmatpush.msra.mxu0 0.0
    %58 = vmatpush.msra.mxu0 0.0
    %59 = vmatpush.msra.mxu0 0.0
    %60 = vmatpush.msra.mxu0 0.0
    %61 = vmatpush.msra.mxu0 0.0
    %62 = vmatpush.msra.mxu0 0.0
    %63 = vmatpush.msra.mxu0 0.0
    %64 = vmatpush.msra.mxu0 0.0
    %65 = vmatpush.msra.mxu0 0.0
    %66 = vmatpush.msra.mxu0 0.0
    %67 = vmatpush.msra.mxu0 %v38
    %68 = vmatmul.f32.gmra.mxu0 %v44
    %v69 = vpop.f32.mrf.mxu0
    %v70 = vadd.f32 0.0, %v69
    %71 = vmatmul.f32.gmra.mxu0 %v47
    %v72 = vpop.f32.mrf.mxu0
    %v73 = vadd.f32 0.0, %v72
    %74 = vmatmul.f32.gmra.mxu0 %v50
    %v75 = vpop.f32.mrf.mxu0
    %v76 = vadd.f32 0.0, %v75
    %77 = vdwg.mxu0
    // While loop
    $region26: #{fwd.1} parent=1 // loop_pre_header
      _
    $region27: #{fwd.1} parent=1 // loop_header
      %s79 = sphi 0, %s340
      %v80 = vphi 0.0, %v297
      %v81 = vphi 0.0, %v298
      %v82 = vphi 0.0, %v299
      %v83 = vphi 0.0, %v309
      %v84 = vphi 0.0, %v310
      %v85 = vphi 0.0, %v311
      %p86 = pphi 0, %p339
      %p87 = scmp.lt.s32.totalorder %s79, 25
      %p88 = pneg %p86
      %p89 = pnand %p87, %p88
      %p90 = pneg %p89
    $region28: #{fwd.1} parent=1 // loop_header_branch
      %92 = sbr.rel (%p89) target = $region32
    $region29: #{fwd.1} parent=1 // loop_body
      %s93 = smul.u32 %s79, 4
      %s94 = sld [smem:[#allocation2 + %s93]]
      %vm95 = vcmask 138240
      %v97 = vsel %vm95, %v33, 0
      %v100 = vsel %vm95, %v34, 0
      %v103 = vsel %vm95, %v35, 0
      %vm105 = vcmask 1040384
      %v107 = vsel %vm105, %v85, 0
      %109 = vmatpush.msra.mxu0 0.0
      %110 = vmatpush.msra.mxu0 0.0
      %111 = vmatpush.msra.mxu0 0.0
      %112 = vmatpush.msra.mxu0 0.0
      %113 = vmatpush.msra.mxu0 0.0
      %114 = vmatpush.msra.mxu0 0.0
      %115 = vmatpush.msra.mxu0 0.0
      %116 = vmatpush.msra.mxu0 0.0
      %117 = vmatpush.msra.mxu0 0.0
      %118 = vmatpush.msra.mxu0 0.0
      %119 = vmatpush.msra.mxu0 0.0
      %120 = vmatpush.msra.mxu0 0.0
      %121 = vmatpush.msra.mxu0 0.0
      %122 = vmatpush.msra.mxu0 %v107
      %123 = vmatpush.msra.mxu0 %v84
      %124 = vmatpush.msra.mxu0 %v83
      %125 = vmatmul.f32.gmra.mxu0 %v97
      %v126 = vpop.f32.mrf.mxu0
      %v127 = vadd.f32 %v70, %v126
      %128 = vmatmul.f32.gmra.mxu0 %v100
      %v129 = vpop.f32.mrf.mxu0
      %v130 = vadd.f32 %v73, %v129
      %131 = vmatmul.f32.gmra.mxu0 %v103
      %v132 = vpop.f32.mrf.mxu0
      %v133 = vadd.f32 %v76, %v132
      %134 = vdwg.mxu0
      %v135 = vmax.f32 %v127, -0.002911377
      %v136 = vmax.f32 %v130, -0.002911377
      %v137 = vmax.f32 %v133, -0.002911377
      %v138 = vmin.f32 %v135, 0.002911377
      %v139 = vmin.f32 %v136, 0.002911377
      %v140 = vmin.f32 %v137, 0.002911377
      %v141 = vsub.f32 %v127, %v138
      %v142 = vsub.f32 %v130, %v139
      %v143 = vsub.f32 %v133, %v140
      %s144 = sadd.f32 %s94, 1.0
      %v145 = vstv %s144
      %v146 = vmul.f32 %v141, %v145
      %v147 = vmul.f32 %v142, %v145
      %v148 = vmul.f32 %v143, %v145
      %v149 = vstv %s94
      %v150 = vmul.f32 %v80, %v149
      %v151 = vmul.f32 %v81, %v149
      %v152 = vmul.f32 %v82, %v149
      %v153 = vsub.f32 %v146, %v150
      %v154 = vsub.f32 %v147, %v151
      %v155 = vsub.f32 %v148, %v152
      %s156 = sadd.s32 %s93, 1
      %s157 = sld [smem:[#allocation2 + %s156]]
      %v159 = vsel %vm105, %v155, 0
      %161 = vmatpush.msra.mxu0 0.0
      %162 = vmatpush.msra.mxu0 0.0
      %163 = vmatpush.msra.mxu0 0.0
      %164 = vmatpush.msra.mxu0 0.0
      %165 = vmatpush.msra.mxu0 0.0
      %166 = vmatpush.msra.mxu0 0.0
      %167 = vmatpush.msra.mxu0 0.0
      %168 = vmatpush.msra.mxu0 0.0
      %169 = vmatpush.msra.mxu0 0.0
      %170 = vmatpush.msra.mxu0 0.0
      %171 = vmatpush.msra.mxu0 0.0
      %172 = vmatpush.msra.mxu0 0.0
      %173 = vmatpush.msra.mxu0 0.0
      %174 = vmatpush.msra.mxu0 %v159
      %175 = vmatpush.msra.mxu0 %v154
      %176 = vmatpush.msra.mxu0 %v153
      %177 = vmatmul.f32.gmra.mxu0 %v97
      %v178 = vpop.f32.mrf.mxu0
      %v179 = vadd.f32 %v70, %v178
      %180 = vmatmul.f32.gmra.mxu0 %v100
      %v181 = vpop.f32.mrf.mxu0
      %v182 = vadd.f32 %v73, %v181
      %183 = vmatmul.f32.gmra.mxu0 %v103
      %v184 = vpop.f32.mrf.mxu0
      %v185 = vadd.f32 %v76, %v184
      %186 = vdwg.mxu0
      %v187 = vmax.f32 %v179, -0.002911377
      %v188 = vmax.f32 %v182, -0.002911377
      %v189 = vmax.f32 %v185, -0.002911377
      %v190 = vmin.f32 %v187, 0.002911377
      %v191 = vmin.f32 %v188, 0.002911377
      %v192 = vmin.f32 %v189, 0.002911377
      %v193 = vsub.f32 %v179, %v190
      %v194 = vsub.f32 %v182, %v191
      %v195 = vsub.f32 %v185, %v192
      %s196 = sadd.f32 %s157, 1.0
      %v197 = vstv %s196
      %v198 = vmul.f32 %v193, %v197
      %v199 = vmul.f32 %v194, %v197
      %v200 = vmul.f32 %v195, %v197
      %v201 = vstv %s157
      %v202 = vmul.f32 %v141, %v201
      %v203 = vmul.f32 %v142, %v201
      %v204 = vmul.f32 %v143, %v201
      %v205 = vsub.f32 %v198, %v202
      %v206 = vsub.f32 %v199, %v203
      %v207 = vsub.f32 %v200, %v204
      %s208 = sadd.s32 %s93, 2
      %s209 = sld [smem:[#allocation2 + %s208]]
      %v211 = vsel %vm105, %v207, 0
      %213 = vmatpush.msra.mxu0 0.0
      %214 = vmatpush.msra.mxu0 0.0
      %215 = vmatpush.msra.mxu0 0.0
      %216 = vmatpush.msra.mxu0 0.0
      %217 = vmatpush.msra.mxu0 0.0
      %218 = vmatpush.msra.mxu0 0.0
      %219 = vmatpush.msra.mxu0 0.0
      %220 = vmatpush.msra.mxu0 0.0
      %221 = vmatpush.msra.mxu0 0.0
      %222 = vmatpush.msra.mxu0 0.0
      %223 = vmatpush.msra.mxu0 0.0
      %224 = vmatpush.msra.mxu0 0.0
      %225 = vmatpush.msra.mxu0 0.0
      %226 = vmatpush.msra.mxu0 %v211
      %227 = vmatpush.msra.mxu0 %v206
      %228 = vmatpush.msra.mxu0 %v205
      %229 = vmatmul.f32.gmra.mxu0 %v97
      %v230 = vpop.f32.mrf.mxu0
      %v231 = vadd.f32 %v70, %v230
      %232 = vmatmul.f32.gmra.mxu0 %v100
      %v233 = vpop.f32.mrf.mxu0
      %v234 = vadd.f32 %v73, %v233
      %235 = vmatmul.f32.gmra.mxu0 %v103
      %v236 = vpop.f32.mrf.mxu0
      %v237 = vadd.f32 %v76, %v236
      %238 = vdwg.mxu0
      %v239 = vmax.f32 %v231, -0.002911377
      %v240 = vmax.f32 %v234, -0.002911377
      %v241 = vmax.f32 %v237, -0.002911377
      %v242 = vmin.f32 %v239, 0.002911377
      %v243 = vmin.f32 %v240, 0.002911377
      %v244 = vmin.f32 %v241, 0.002911377
      %v245 = vsub.f32 %v231, %v242
      %v246 = vsub.f32 %v234, %v243
      %v247 = vsub.f32 %v237, %v244
      %s248 = sadd.f32 %s209, 1.0
      %v249 = vstv %s248
      %v250 = vmul.f32 %v245, %v249
      %v251 = vmul.f32 %v246, %v249
      %v252 = vmul.f32 %v247, %v249
      %v253 = vstv %s209
      %v254 = vmul.f32 %v193, %v253
      %v255 = vmul.f32 %v194, %v253
      %v256 = vmul.f32 %v195, %v253
      %v257 = vsub.f32 %v250, %v254
      %v258 = vsub.f32 %v251, %v255
      %v259 = vsub.f32 %v252, %v256
      %s260 = sadd.s32 %s93, 3
      %s261 = sld [smem:[#allocation2 + %s260]]
      %v263 = vsel %vm105, %v259, 0
      %265 = vmatpush.msra.mxu0 0.0
      %266 = vmatpush.msra.mxu0 0.0
      %267 = vmatpush.msra.mxu0 0.0
      %268 = vmatpush.msra.mxu0 0.0
      %269 = vmatpush.msra.mxu0 0.0
      %270 = vmatpush.msra.mxu0 0.0
      %271 = vmatpush.msra.mxu0 0.0
      %272 = vmatpush.msra.mxu0 0.0
      %273 = vmatpush.msra.mxu0 0.0
      %274 = vmatpush.msra.mxu0 0.0
      %275 = vmatpush.msra.mxu0 0.0
      %276 = vmatpush.msra.mxu0 0.0
      %277 = vmatpush.msra.mxu0 0.0
      %278 = vmatpush.msra.mxu0 %v263
      %279 = vmatpush.msra.mxu0 %v258
      %280 = vmatpush.msra.mxu0 %v257
      %281 = vmatmul.f32.gmra.mxu0 %v97
      %v282 = vpop.f32.mrf.mxu0
      %v283 = vadd.f32 %v70, %v282
      %284 = vmatmul.f32.gmra.mxu0 %v100
      %v285 = vpop.f32.mrf.mxu0
      %v286 = vadd.f32 %v73, %v285
      %287 = vmatmul.f32.gmra.mxu0 %v103
      %v288 = vpop.f32.mrf.mxu0
      %v289 = vadd.f32 %v76, %v288
      %290 = vdwg.mxu0
      %v291 = vmax.f32 %v283, -0.002911377
      %v292 = vmax.f32 %v286, -0.002911377
      %v293 = vmax.f32 %v289, -0.002911377
      %v294 = vmin.f32 %v291, 0.002911377
      %v295 = vmin.f32 %v292, 0.002911377
      %v296 = vmin.f32 %v293, 0.002911377
      %v297 = vsub.f32 %v283, %v294
      %v298 = vsub.f32 %v286, %v295
      %v299 = vsub.f32 %v289, %v296
      %s300 = sadd.f32 %s261, 1.0
      %v301 = vstv %s300
      %v302 = vmul.f32 %v297, %v301
      %v303 = vmul.f32 %v298, %v301
      %v304 = vmul.f32 %v299, %v301
      %v305 = vstv %s261
      %v306 = vmul.f32 %v245, %v305
      %v307 = vmul.f32 %v246, %v305
      %v308 = vmul.f32 %v247, %v305
      %v309 = vsub.f32 %v302, %v306
      %v310 = vsub.f32 %v303, %v307
      %v311 = vsub.f32 %v304, %v308
      %v312 = vsub.f32 %v245, %v297
      %v313 = vsub.f32 %v246, %v298
      %v314 = vsub.f32 %v247, %v299
      %v315 = vmul.f32 %v312, %v312
      %v316 = vmul.f32 %v313, %v313
      %v317 = vmul.f32 %v314, %v314
      %v318 = vadd.f32 %v315, %v316
      %v319 = vsel %vm105, %v317, 0.0
      %v320 = vadd.f32 %v318, %v319
      %v321 = vrot.slane %v320, 4
      %v322 = vadd.f32 %v320, %v321
      %v323 = vrot.slane %v322, 2
      %v324 = vadd.f32 %v322, %v323
      %v325 = vrot.slane %v324, 1
      %v326 = vadd.f32 %v324, %v325
      %v327 = vsel %vm105, %v326, 0.0
      %328 = vadd.xlane.f32.xlu0 %v327
      %v329 = vpop.xlane.xlu0 %328
      %v330 = vrot.slane %v329, 4
      %v331 = vadd.f32 %v329, %v330
      %v332 = vrot.slane %v331, 2
      %v333 = vadd.f32 %v331, %v332
      %v334 = vrot.slane %v333, 1
      %v335 = vadd.f32 %v333, %v334
      %s336 = vtos %v335
      %p337 = scmp.eq.s32.totalorder %s260, 0
      %s338 = scalar_select %p337, 2.56e-06, 2.89e-06
      %p339 = scmp.lt.f32.partialorder %s336, %s338
      %s340 = sadd.s32 %s79, 1
    $region30: #{fwd.1} parent=1 // loop_footer
      _
    $region31: #{fwd.1} parent=1 // loop_footer_branch
      %78 = sbr.rel target = $region27
    $region32: #{fwd.1} parent=1 // loop_exit
      _
    %vm341 = vcmask 138240
    %v343 = vsel %vm341, %v36, 0
    %v346 = vsel %vm341, %v37, 0
    %vm348 = vcmask 1040384
    %v350 = vsel %vm348, %v82, 0
    %352 = vmatpush.msra.mxu0 0.0
    %353 = vmatpush.msra.mxu0 0.0
    %354 = vmatpush.msra.mxu0 0.0
    %355 = vmatpush.msra.mxu0 0.0
    %356 = vmatpush.msra.mxu0 0.0
    %357 = vmatpush.msra.mxu0 0.0
    %358 = vmatpush.msra.mxu0 0.0
    %359 = vmatpush.msra.mxu0 0.0
    %360 = vmatpush.msra.mxu0 0.0
    %361 = vmatpush.msra.mxu0 0.0
    %362 = vmatpush.msra.mxu0 0.0
    %363 = vmatpush.msra.mxu0 0.0
    %364 = vmatpush.msra.mxu0 0.0
    %365 = vmatpush.msra.mxu0 %v350
    %366 = vmatpush.msra.mxu0 %v81
    %367 = vmatpush.msra.mxu0 %v80
    %368 = vmatmul.f32.gmra.mxu0 %v343
    %v369 = vpop.f32.mrf.mxu0
    %v370 = vadd.f32 0.0, %v369
    %371 = vmatmul.f32.gmra.mxu0 %v346
    %v372 = vpop.f32.mrf.mxu0
    %v373 = vadd.f32 0.0, %v372
    %374 = vdwg.mxu0
    %375 = vst [vmem:[%s5] sm:$0xff] %v370
    %376 = vst [vmem:[%s5 + $0x8] sm:$0x3] %v373
    // Predicated region
    $region33: #{fwd.1} parent=1 // pred_check
      _
    $region34: #{fwd.1} parent=1 // pred_check_branch
      %378 = sbr.rel (0) target = $region36
    $region35: #{fwd.1} parent=1 // pred_region
      _
    $region36: #{fwd.1} parent=1 // pred_fallthru
      _
    // Predicated region
    $region37: #{fwd.1} parent=1 // pred_check
      _
    $region38: #{fwd.1} parent=1 // pred_check_branch
      %380 = sbr.rel (0) target = $region40
    $region39: #{fwd.1} parent=1 // pred_region
      _
    $region40: #{fwd.1} parent=1 // pred_fallthru
      _
    %381 = vsyncpa [#allocation3], 1

</llo_original>
